<compile_context>
chip_gen: v7x
topology: tpu7x:2x2x1
jax: 0.10.0
libtpu: 0.0.40
codegen_flags: <defaults>
</compile_context>

<pallas_src>
import functools

import jax
import jax.numpy as jnp
from jax.experimental import pallas as pl
from jax.experimental.pallas import tpu as pltpu

LOG_STD_MIN = -20.0
LOG_STD_MAX = 2.0


def _round_up(x, m):
    return ((x + m - 1) // m) * m


def gaussian_policy_kernel(state_ref,
                           w1_ref, b1_ref,
                           w2_ref, b2_ref,
                           wh_ref, bh_ref,
                           mean_ref, log_std_ref,
                           *, action_dim):
    """One grid step: a (TB, state_dim) slab of states -> (TB, A) mean / log_std.

    Hot path: 3 matmuls (MXU, bf16 operands / f32 accumulate), bias add + ReLU
    + clamp on the VPU in f32, all operands VMEM-resident.  The fused head
    output stays 128-lane-dense in VMEM; only the real columns reach HBM.
    """
    cd = w1_ref.dtype
    # f32 -> bf16 cast in-kernel (VPU slack) instead of a separate XLA pass.
    x = state_ref[...].astype(cd)                         # [TB, S] bf16

    h = jnp.dot(x, w1_ref[...], preferred_element_type=jnp.float32) + b1_ref[...]
    h = jnp.maximum(h, 0.0).astype(cd)                    # relu in f32, cast for MXU

    h = jnp.dot(h, w2_ref[...], preferred_element_type=jnp.float32) + b2_ref[...]
    h = jnp.maximum(h, 0.0).astype(cd)

    # Fused head: columns [0, A) are mean, [A, 2A) are log_std, rest is zero
    # padding that never leaves VMEM.
    head = jnp.dot(h, wh_ref[...], preferred_element_type=jnp.float32) + bh_ref[...]

    mean_ref[...] = head[:, :action_dim].astype(mean_ref.dtype)
    log_std_ref[...] = jnp.clip(
        head[:, action_dim:2 * action_dim], LOG_STD_MIN, LOG_STD_MAX
    ).astype(log_std_ref.dtype)


def prepare_params(params, compute_dtype=jnp.bfloat16):
    """Fuse the two heads, zero-pad out-features to lane-dense widths, cast weights.

    Zero padding of weight rows/cols and bias entries is numerically exact:
    padded hidden lanes stay 0 through ReLU and contribute 0 to later dots.
    """
    w1, b1 = params["w1"], params["b1"]
    w2, b2 = params["w2"], params["b2"]
    wm, bm = params["wm"], params["bm"]
    ws, bs = params["ws"], params["bs"]

    state_dim, hidden = w1.shape
    action_dim = wm.shape[1]

    # Lane-dense hidden width; once hidden >= 256, keep it a multiple of 256 so
    # each vmatmul fills the full 256-wide MXU on v6e/v7x.  Do NOT pad a
    # 128-hidden net to 256 (doubles FLOPs on zeros for no gain).
    h_pad = _round_up(hidden, 128 if hidden <= 128 else 256)
    out_pad = _round_up(2 * action_dim, 128)

    def pad2(a, rows, cols):
        return jnp.pad(a, ((0, rows - a.shape[0]), (0, cols - a.shape[1])))

    w1p = pad2(w1, state_dim, h_pad)
    b1p = pad2(b1, 1, h_pad)
    w2p = pad2(w2, h_pad, h_pad)
    b2p = pad2(b2, 1, h_pad)

    wh = jnp.concatenate([wm, ws], axis=1)               # [hidden, 2A]
    bh = jnp.concatenate([bm, bs], axis=1)               # [1, 2A]
    whp = pad2(wh, h_pad, out_pad)
    bhp = pad2(bh, 1, out_pad)

    return {
        "w1": w1p.astype(compute_dtype), "b1": b1p.astype(jnp.float32),
        "w2": w2p.astype(compute_dtype), "b2": b2p.astype(jnp.float32),
        "wh": whp.astype(compute_dtype), "bh": bhp.astype(jnp.float32),
        "action_dim": action_dim,
    }


def gaussian_policy_forward(state, prepped, *, block_b=1024):
    """state: [B, state_dim] float32; prepped: output of prepare_params.

    Returns (mean, log_std), both float32 [B, action_dim].
    """
    B, state_dim = state.shape
    action_dim = prepped["action_dim"]
    h_pad = prepped["w1"].shape[1]
    out_pad = prepped["wh"].shape[1]

    # Batch tile: as large as possible (amortizes ~0.35 us/grid-step), multiple
    # of 8 (sublane).  VMEM stays tiny at these widths even at tb=2048.
    tb = min(block_b, _round_up(B, 8))
    # v7x: keep >= 2 grid steps so the "parallel" batch axis shards across both
    # TensorCores; no-op on v5e/v6e (1 TC) and when B <= 8.
    if B > 8 and pl.cdiv(B, tb) < 2:
        tb = max(8, _round_up(pl.cdiv(B, 2), 8))

    grid = (pl.cdiv(B, tb),)   # ragged last block: writes are masked, rows are independent

    # Grid-invariant weights/biases stay VMEM-resident across steps.
    # NOTE: if hidden_dim is ever scaled up (w2 grows as h_pad^2), single-buffer
    # these specs (pipeline_mode=pl.Buffered(1)) and set vmem_limit_bytes so the
    # footprint respects v7x's 64 MiB VMEM; irrelevant at hidden <= 1024.
    resident = lambda shape: pl.BlockSpec(shape, lambda i: (0, 0))

    in_specs = [
        pl.BlockSpec((tb, state_dim), lambda i: (i, 0)),   # f32 state, tiled over batch
        resident((state_dim, h_pad)),                      # w1
        resident((1, h_pad)),                              # b1
        resident((h_pad, h_pad)),                          # w2
        resident((1, h_pad)),                              # b2
        resident((h_pad, out_pad)),                        # fused head weight
        resident((1, out_pad)),                            # fused head bias
    ]
    out_specs = [
        pl.BlockSpec((tb, action_dim), lambda i: (i, 0)),  # mean
        pl.BlockSpec((tb, action_dim), lambda i: (i, 0)),  # log_std
    ]
    out_shape = (
        jax.ShapeDtypeStruct((B, action_dim), jnp.float32),
        jax.ShapeDtypeStruct((B, action_dim), jnp.float32),
    )

    kernel = functools.partial(gaussian_policy_kernel, action_dim=action_dim)

    mean, log_std = pl.pallas_call(
        kernel,
        out_shape=out_shape,
        grid=grid,
        in_specs=in_specs,
        out_specs=out_specs,
        compiler_params=pltpu.CompilerParams(
            dimension_semantics=("parallel",)),
    )(state, prepped["w1"], prepped["b1"],
      prepped["w2"], prepped["b2"],
      prepped["wh"], prepped["bh"])

    return mean, log_std


def init_params(key, state_dim, action_dim, hidden_dim):
    """Deterministic init matching nn.Linear shapes (stored transposed: [in, out])."""
    ks = jax.random.split(key, 8)

    def linear(kw, kb, fan_in, fan_out):
        bound = 1.0 / jnp.sqrt(fan_in)
        w = jax.random.uniform(kw, (fan_in, fan_out), jnp.float32, -bound, bound)
        b = jax.random.uniform(kb, (1, fan_out), jnp.float32, -bound, bound)
        return w, b

    w1, b1 = linear(ks[0], ks[1], state_dim, hidden_dim)
    w2, b2 = linear(ks[2], ks[3], hidden_dim, hidden_dim)
    wm, bm = linear(ks[4], ks[5], hidden_dim, action_dim)
    ws, bs = linear(ks[6], ks[7], hidden_dim, action_dim)
    return dict(w1=w1, b1=b1, w2=w2, b2=b2, wm=wm, bm=bm, ws=ws, bs=bs)


def reference_forward(state, p, compute_dtype=jnp.bfloat16):
    """Pure-JAX reference using the same bf16-operand / f32-accumulate numerics."""
    cd = compute_dtype
    x = state.astype(cd)
    h = jnp.dot(x, p["w1"].astype(cd), preferred_element_type=jnp.float32) + p["b1"]
    h = jnp.maximum(h, 0.0).astype(cd)
    h = jnp.dot(h, p["w2"].astype(cd), preferred_element_type=jnp.float32) + p["b2"]
    h = jnp.maximum(h, 0.0).astype(cd)
    mean = jnp.dot(h, p["wm"].astype(cd), preferred_element_type=jnp.float32) + p["bm"]
    log_std = jnp.dot(h, p["ws"].astype(cd), preferred_element_type=jnp.float32) + p["bs"]
    log_std = jnp.clip(log_std, LOG_STD_MIN, LOG_STD_MAX)
    return mean, log_std


if __name__ == "__main__":
    key = jax.random.PRNGKey(0)
    k_state, k_state2, k_params = jax.random.split(key, 3)

    # Small shapes consistent with the module (hidden_dim default 256).
    B, state_dim, action_dim, hidden_dim = 32, 16, 6, 256
    state = jax.random.normal(k_state, (B, state_dim), dtype=jnp.float32)
    params = init_params(k_params, state_dim, action_dim, hidden_dim)

    prepped = prepare_params(params, compute_dtype=jnp.bfloat16)
    mean, log_std = gaussian_policy_forward(state, prepped)
    jax.block_until_ready((mean, log_std))

    # Correctness vs pure-JAX reference with identical bf16/f32 numerics.
    mean_ref, log_std_ref = reference_forward(state, params)
    assert mean.shape == (B, action_dim) and log_std.shape == (B, action_dim)
    assert jnp.allclose(mean, mean_ref, atol=2e-2, rtol=2e-2), "mean mismatch"
    assert jnp.allclose(log_std, log_std_ref, atol=2e-2, rtol=2e-2), "log_std mismatch"
    assert bool(jnp.all(log_std <= LOG_STD_MAX)) and bool(jnp.all(log_std >= LOG_STD_MIN))

    # Ragged batch (not a multiple of the tile) exercises the masked edge block.
    B2 = 20
    state2 = jax.random.normal(k_state2, (B2, state_dim), dtype=jnp.float32)
    mean2, log_std2 = gaussian_policy_forward(state2, prepped)
    jax.block_until_ready((mean2, log_std2))
    mean2_ref, log_std2_ref = reference_forward(state2, params)
    assert mean2.shape == (B2, action_dim) and log_std2.shape == (B2, action_dim)
    assert jnp.allclose(mean2, mean2_ref, atol=2e-2, rtol=2e-2), "ragged mean mismatch"
    assert jnp.allclose(log_std2, log_std2_ref, atol=2e-2, rtol=2e-2), "ragged log_std mismatch"

    print("KERNEL_OK")
</pallas_src>

<mosaic_0001>
module attributes {stable_mosaic.version = 11 : i64} {
  func.func @gaussian_policy_kernel(%arg0: i32, %arg1: memref<16x16xf32, #tpu.memory_space<vmem>>, %arg2: memref<16x256xbf16, #tpu.memory_space<vmem>>, %arg3: memref<1x256xf32, #tpu.memory_space<vmem>>, %arg4: memref<256x256xbf16, #tpu.memory_space<vmem>>, %arg5: memref<1x256xf32, #tpu.memory_space<vmem>>, %arg6: memref<256x128xbf16, #tpu.memory_space<vmem>>, %arg7: memref<1x128xf32, #tpu.memory_space<vmem>>, %arg8: memref<16x6xf32, #tpu.memory_space<vmem>>, %arg9: memref<16x6xf32, #tpu.memory_space<vmem>>) attributes {dimension_semantics = [#tpu.dimension_semantics<parallel>], iteration_bounds = array<i64: 2>, scalar_prefetch = 0 : i64, scratch_operands = 0 : i64, tpu.core_type = #tpu.core_type<tc>, window_params = [{transform_indices = @transform_0, window_bounds = array<i64: 16, 16>}, {pipeline_mode = #tpu.pipeline_mode<synchronous>, transform_indices = @transform_1, window_bounds = array<i64: 16, 256>}, {pipeline_mode = #tpu.pipeline_mode<synchronous>, transform_indices = @transform_2, window_bounds = array<i64: 1, 256>}, {pipeline_mode = #tpu.pipeline_mode<synchronous>, transform_indices = @transform_3, window_bounds = array<i64: 256, 256>}, {pipeline_mode = #tpu.pipeline_mode<synchronous>, transform_indices = @transform_4, window_bounds = array<i64: 1, 256>}, {pipeline_mode = #tpu.pipeline_mode<synchronous>, transform_indices = @transform_5, window_bounds = array<i64: 256, 128>}, {pipeline_mode = #tpu.pipeline_mode<synchronous>, transform_indices = @transform_6, window_bounds = array<i64: 1, 128>}, {transform_indices = @transform_7, window_bounds = array<i64: 16, 6>}, {transform_indices = @transform_8, window_bounds = array<i64: 16, 6>}]} {
    %c0 = arith.constant 0 : index
    %c0_0 = arith.constant 0 : index
    %0 = vector.load %arg1[%c0, %c0_0] : memref<16x16xf32, #tpu.memory_space<vmem>>, vector<16x16xf32>
    %1 = arith.truncf %0 : vector<16x16xf32> to vector<16x16xbf16>
    %c0_1 = arith.constant 0 : index
    %c0_2 = arith.constant 0 : index
    %2 = vector.load %arg2[%c0_1, %c0_2] : memref<16x256xbf16, #tpu.memory_space<vmem>>, vector<16x256xbf16>
    %cst = arith.constant dense<0.000000e+00> : vector<16x256xf32>
    %3 = tpu.matmul %1, %2, %cst {dimension_numbers = #tpu.dot_dimension_numbers<[1], [0], [0], [1], [0, 0, 1, 1], [], []>} : vector<16x16xbf16>, vector<16x256xbf16>, vector<16x256xf32> -> vector<16x256xf32>
    %c0_3 = arith.constant 0 : index
    %c0_4 = arith.constant 0 : index
    %4 = vector.load %arg3[%c0_3, %c0_4] : memref<1x256xf32, #tpu.memory_space<vmem>>, vector<1x256xf32>
    %5 = vector.broadcast %4 : vector<1x256xf32> to vector<16x256xf32>
    %6 = arith.addf %3, %5 : vector<16x256xf32>
    %cst_5 = arith.constant 0.000000e+00 : f32
    %7 = vector.broadcast %cst_5 : f32 to vector<16x256xf32>
    %8 = arith.maximumf %6, %7 : vector<16x256xf32>
    %9 = arith.truncf %8 : vector<16x256xf32> to vector<16x256xbf16>
    %c0_6 = arith.constant 0 : index
    %c0_7 = arith.constant 0 : index
    %10 = vector.load %arg4[%c0_6, %c0_7] : memref<256x256xbf16, #tpu.memory_space<vmem>>, vector<256x256xbf16>
    %cst_8 = arith.constant dense<0.000000e+00> : vector<16x256xf32>
    %11 = tpu.matmul %9, %10, %cst_8 {dimension_numbers = #tpu.dot_dimension_numbers<[1], [0], [0], [1], [0, 0, 1, 1], [], []>} : vector<16x256xbf16>, vector<256x256xbf16>, vector<16x256xf32> -> vector<16x256xf32>
    %c0_9 = arith.constant 0 : index
    %c0_10 = arith.constant 0 : index
    %12 = vector.load %arg5[%c0_9, %c0_10] : memref<1x256xf32, #tpu.memory_space<vmem>>, vector<1x256xf32>
    %13 = vector.broadcast %12 : vector<1x256xf32> to vector<16x256xf32>
    %14 = arith.addf %11, %13 : vector<16x256xf32>
    %cst_11 = arith.constant 0.000000e+00 : f32
    %15 = vector.broadcast %cst_11 : f32 to vector<16x256xf32>
    %16 = arith.maximumf %14, %15 : vector<16x256xf32>
    %17 = arith.truncf %16 : vector<16x256xf32> to vector<16x256xbf16>
    %c0_12 = arith.constant 0 : index
    %c0_13 = arith.constant 0 : index
    %18 = vector.load %arg6[%c0_12, %c0_13] : memref<256x128xbf16, #tpu.memory_space<vmem>>, vector<256x128xbf16>
    %cst_14 = arith.constant dense<0.000000e+00> : vector<16x128xf32>
    %19 = tpu.matmul %17, %18, %cst_14 {dimension_numbers = #tpu.dot_dimension_numbers<[1], [0], [0], [1], [0, 0, 1, 1], [], []>} : vector<16x256xbf16>, vector<256x128xbf16>, vector<16x128xf32> -> vector<16x128xf32>
    %c0_15 = arith.constant 0 : index
    %c0_16 = arith.constant 0 : index
    %20 = vector.load %arg7[%c0_15, %c0_16] : memref<1x128xf32, #tpu.memory_space<vmem>>, vector<1x128xf32>
    %21 = vector.broadcast %20 : vector<1x128xf32> to vector<16x128xf32>
    %22 = arith.addf %19, %21 : vector<16x128xf32>
    %23 = vector.extract_strided_slice %22 {offsets = [0, 0], sizes = [16, 6], strides = [1, 1]} : vector<16x128xf32> to vector<16x6xf32>
    %c0_17 = arith.constant 0 : index
    %c0_18 = arith.constant 0 : index
    %24 = vector.load %arg8[%c0_17, %c0_18] : memref<16x6xf32, #tpu.memory_space<vmem>>, vector<16x6xf32>
    tpu.vector_store %arg8[%c0_17, %c0_18], %23 {strides = array<i32>} : memref<16x6xf32, #tpu.memory_space<vmem>>, vector<16x6xf32>,
    %25 = vector.extract_strided_slice %22 {offsets = [0, 6], sizes = [16, 6], strides = [1, 1]} : vector<16x128xf32> to vector<16x6xf32>
    %cst_19 = arith.constant -2.000000e+01 : f32
    %cst_20 = arith.constant 2.000000e+00 : f32
    %26 = vector.broadcast %cst_19 : f32 to vector<16x6xf32>
    %27 = arith.maximumf %26, %25 : vector<16x6xf32>
    %28 = vector.broadcast %cst_20 : f32 to vector<16x6xf32>
    %29 = arith.minimumf %28, %27 : vector<16x6xf32>
    %c0_21 = arith.constant 0 : index
    %c0_22 = arith.constant 0 : index
    %30 = vector.load %arg9[%c0_21, %c0_22] : memref<16x6xf32, #tpu.memory_space<vmem>>, vector<16x6xf32>
    tpu.vector_store %arg9[%c0_21, %c0_22], %29 {strides = array<i32>} : memref<16x6xf32, #tpu.memory_space<vmem>>, vector<16x6xf32>,
    return
  }
  func.func @transform_0(%arg0: i32) -> (i32, i32) {
    %c0_i32 = arith.constant 0 : i32
    %c0_i32_0 = arith.constant 0 : i32
    return %arg0, %c0_i32 : i32, i32
  }
  func.func @transform_1(%arg0: i32) -> (i32, i32) {
    %c0_i32 = arith.constant 0 : i32
    %c0_i32_0 = arith.constant 0 : i32
    %c0_i32_1 = arith.constant 0 : i32
    return %c0_i32, %c0_i32_0 : i32, i32
  }
  func.func @transform_2(%arg0: i32) -> (i32, i32) {
    %c0_i32 = arith.constant 0 : i32
    %c0_i32_0 = arith.constant 0 : i32
    %c0_i32_1 = arith.constant 0 : i32
    return %c0_i32, %c0_i32_0 : i32, i32
  }
  func.func @transform_3(%arg0: i32) -> (i32, i32) {
    %c0_i32 = arith.constant 0 : i32
    %c0_i32_0 = arith.constant 0 : i32
    %c0_i32_1 = arith.constant 0 : i32
    return %c0_i32, %c0_i32_0 : i32, i32
  }
  func.func @transform_4(%arg0: i32) -> (i32, i32) {
    %c0_i32 = arith.constant 0 : i32
    %c0_i32_0 = arith.constant 0 : i32
    %c0_i32_1 = arith.constant 0 : i32
    return %c0_i32, %c0_i32_0 : i32, i32
  }
  func.func @transform_5(%arg0: i32) -> (i32, i32) {
    %c0_i32 = arith.constant 0 : i32
    %c0_i32_0 = arith.constant 0 : i32
    %c0_i32_1 = arith.constant 0 : i32
    return %c0_i32, %c0_i32_0 : i32, i32
  }
  func.func @transform_6(%arg0: i32) -> (i32, i32) {
    %c0_i32 = arith.constant 0 : i32
    %c0_i32_0 = arith.constant 0 : i32
    %c0_i32_1 = arith.constant 0 : i32
    return %c0_i32, %c0_i32_0 : i32, i32
  }
  func.func @transform_7(%arg0: i32) -> (i32, i32) {
    %c0_i32 = arith.constant 0 : i32
    %c0_i32_0 = arith.constant 0 : i32
    return %arg0, %c0_i32 : i32, i32
  }
  func.func @transform_8(%arg0: i32) -> (i32, i32) {
    %c0_i32 = arith.constant 0 : i32
    %c0_i32_0 = arith.constant 0 : i32
    return %arg0, %c0_i32 : i32, i32
  }
}

</mosaic_0001>

<llo_original>
// kernel: tpu_custom_call.1
$region0: #{tpu_custom_call.1}
  #allocation0 [shape = 'u32[]', space=smem, size = 0x4, offset = 0x4, fixed_abs, tag = 'smem constant byte address 0x4 - core index']
  #allocation1 [shape = 'u32[144,128]{1,0:T(1,128)}', space=vmem, size = 0x12000, scoped, tag = 'internal scratch']
  %s0 = inlined_call_operand.vmem [shape: f32[32,16], index: 0, kind: input, shape index: {}]
  %s1 = inlined_call_operand.vmem [shape: bf16[16,256], index: 1, kind: input, shape index: {}]
  %s2 = inlined_call_operand.vmem [shape: f32[1,256], index: 2, kind: input, shape index: {}]
  %s3 = inlined_call_operand.hbm [shape: bf16[256,256], index: 3, kind: input, shape index: {}]
  %s4 = inlined_call_operand.vmem [shape: f32[1,256], index: 4, kind: input, shape index: {}]
  %s5 = inlined_call_operand.hbm [shape: bf16[256,128], index: 5, kind: input, shape index: {}]
  %s6 = inlined_call_operand.vmem [shape: f32[1,128], index: 6, kind: input, shape index: {}]
  %s7 = inlined_call_operand.vmem [shape: f32[32,6], index: 7, kind: output, shape index: {0}]
  %s8 = inlined_call_operand.vmem [shape: f32[32,6], index: 8, kind: output, shape index: {1}]
  %9 = xla_tuple %s7, %s8
  %s10 = sld [smem:[#allocation0]]
  $region77: #{tpu_custom_call.1} parent=0
    _
  %s12 = ssub.s32 1, %s10
  %s13 = scalar_select 0, %s12, %s10
  $region1: #{tpu_custom_call.1} parent=0
    #allocation2 [shape = 'u8[131072]{0}', space=vmem, size = 0x20000, scoped, tag = 'input window, operand 3, single buffered']
    #allocation3 [shape = 's32[2]{0}', space=sflag, size = 0x8, scoped, tag = 'scoped memory for tpu_custom_call.1']
    #allocation4 [shape = 'u8[65536]{0}', space=vmem, size = 0x10000, scoped, tag = 'input window, operand 5, single buffered']
    #allocation5 [shape = 's32[1]{0}', space=sflag, size = 0x4, scoped, tag = 'scoped memory for tpu_custom_call.1']
    %14 = vsyncpa [#allocation3], 0
    %15 = vsyncpa [#allocation5], 0
    loop: start=0, step=1, limit=4
    $region2: #{tpu_custom_call.1} parent=1 // loop_pre_header
      _
    $region3: #{tpu_custom_call.1} parent=1 // loop_header
      %s17 = sphi 0, %s21
      %p18 = scmp.ge.s32.totalorder %s17, 4
      %s27 = sphi 0, %s29
      %s30 = sphi 0, %s27
      %s31 = sphi 0, %s30
      %s47 = sphi 0, %s31
      %s51 = sphi 0, %s51
      %s53 = sphi 0, %s51
      %s54 = sphi 0, %s53
      %s68 = sphi 0, %s54
      %s72 = sphi 0, %s72
      %s74 = sphi 0, %s72
      %s75 = sphi 0, %s74
      %s89 = sphi 0, %s75
      %s93 = sphi 0, %s93
      %s95 = sphi 0, %s93
      %s96 = sphi 0, %s95
      %s110 = sphi 0, %s96
      %s114 = sphi 0, %s114
      %s116 = sphi 0, %s114
      %s117 = sphi 0, %s116
      %s131 = sphi 0, %s117
      %s135 = sphi 0, %s135
      %s137 = sphi 0, %s135
      %s138 = sphi 0, %s137
      %s152 = sphi 0, %s138
      %s156 = sphi 0, %s156
      %s158 = sphi 0, %s156
      %s159 = sphi 0, %s158
      %s173 = sphi 0, %s159
      %s179 = sphi 0, %s181
      %s182 = sphi 0, %s179
      %s183 = sphi 0, %s182
      %s199 = sphi 0, %s183
      %s205 = sphi 0, %s207
      %s208 = sphi 0, %s205
      %s209 = sphi 0, %s208
      %s225 = sphi 0, %s209
    $region4: #{tpu_custom_call.1} parent=1 // loop_header_branch
      %20 = sbr.rel (%p18) target = $region8
    $region5: #{tpu_custom_call.1} parent=1 // loop_body
      %s22 = ssub.s32 %s17, 1
      %s23 = ssub.s32 %s17, 2
      %s24 = sadd.s32 %s17, 1
      %s25 = ssub.s32 %s17, %s24
      %p26 = scmp.eq.s32.totalorder %s25, 0
      %s28 = sadd.s32 %s27, 1
      %s29 = scalar_select %p26, %s27, %s28
      %p32 = pneg %p26
      %p33 = scmp.eq.s32.totalorder %s17, 1
      %p34 = por %p32, %p33
      %p35 = scmp.ne.s32.totalorder %s27, %s30
      %p36 = scmp.eq.s32.totalorder %s17, 0
      %p37 = por %p35, %p36
      %p38 = scmp.ne.s32.totalorder %s27, %s30
      %p39 = scmp.eq.s32.totalorder %s22, 1
      %p40 = por %p38, %p39
      %p41 = scmp.ne.s32.totalorder %s30, %s31
      %p42 = scmp.eq.s32.totalorder %s22, 0
      %p43 = por %p41, %p42
      %p44 = scmp.ne.s32.totalorder %s30, %s31
      %p45 = scmp.eq.s32.totalorder %s23, 1
      %p46 = por %p44, %p45
      %p48 = scmp.ne.s32.totalorder %s31, %s47
      %p49 = scmp.eq.s32.totalorder %s23, 0
      %p50 = por %p48, %p49
      %s52 = sadd.s32 %s51, 1
      %p55 = scmp.eq.s32.totalorder %s17, 1
      %p56 = scmp.ne.s32.totalorder %s51, %s53
      %p57 = scmp.eq.s32.totalorder %s17, 0
      %p58 = por %p56, %p57
      %p59 = scmp.ne.s32.totalorder %s51, %s53
      %p60 = scmp.eq.s32.totalorder %s22, 1
      %p61 = por %p59, %p60
      %p62 = scmp.ne.s32.totalorder %s53, %s54
      %p63 = scmp.eq.s32.totalorder %s22, 0
      %p64 = por %p62, %p63
      %p65 = scmp.ne.s32.totalorder %s53, %s54
      %p66 = scmp.eq.s32.totalorder %s23, 1
      %p67 = por %p65, %p66
      %p69 = scmp.ne.s32.totalorder %s54, %s68
      %p70 = scmp.eq.s32.totalorder %s23, 0
      %p71 = por %p69, %p70
      %s73 = sadd.s32 %s72, 1
      %p76 = scmp.eq.s32.totalorder %s17, 1
      %p77 = scmp.ne.s32.totalorder %s72, %s74
      %p78 = scmp.eq.s32.totalorder %s17, 0
      %p79 = por %p77, %p78
      %p80 = scmp.ne.s32.totalorder %s72, %s74
      %p81 = scmp.eq.s32.totalorder %s22, 1
      %p82 = por %p80, %p81
      %p83 = scmp.ne.s32.totalorder %s74, %s75
      %p84 = scmp.eq.s32.totalorder %s22, 0
      %p85 = por %p83, %p84
      %p86 = scmp.ne.s32.totalorder %s74, %s75
      %p87 = scmp.eq.s32.totalorder %s23, 1
      %p88 = por %p86, %p87
      %p90 = scmp.ne.s32.totalorder %s75, %s89
      %p91 = scmp.eq.s32.totalorder %s23, 0
      %p92 = por %p90, %p91
      %s94 = sadd.s32 %s93, 1
      %p97 = scmp.eq.s32.totalorder %s17, 1
      %p98 = scmp.ne.s32.totalorder %s93, %s95
      %p99 = scmp.eq.s32.totalorder %s17, 0
      %p100 = por %p98, %p99
      %p101 = scmp.ne.s32.totalorder %s93, %s95
      %p102 = scmp.eq.s32.totalorder %s22, 1
      %p103 = por %p101, %p102
      %p104 = scmp.ne.s32.totalorder %s95, %s96
      %p105 = scmp.eq.s32.totalorder %s22, 0
      %p106 = por %p104, %p105
      %p107 = scmp.ne.s32.totalorder %s95, %s96
      %p108 = scmp.eq.s32.totalorder %s23, 1
      %p109 = por %p107, %p108
      %p111 = scmp.ne.s32.totalorder %s96, %s110
      %p112 = scmp.eq.s32.totalorder %s23, 0
      %p113 = por %p111, %p112
      %s115 = sadd.s32 %s114, 1
      %p118 = scmp.eq.s32.totalorder %s17, 1
      %p119 = scmp.ne.s32.totalorder %s114, %s116
      %p120 = scmp.eq.s32.totalorder %s17, 0
      %p121 = por %p119, %p120
      %p122 = scmp.ne.s32.totalorder %s114, %s116
      %p123 = scmp.eq.s32.totalorder %s22, 1
      %p124 = por %p122, %p123
      %p125 = scmp.ne.s32.totalorder %s116, %s117
      %p126 = scmp.eq.s32.totalorder %s22, 0
      %p127 = por %p125, %p126
      %p128 = scmp.ne.s32.totalorder %s116, %s117
      %p129 = scmp.eq.s32.totalorder %s23, 1
      %p130 = por %p128, %p129
      %p132 = scmp.ne.s32.totalorder %s117, %s131
      %p133 = scmp.eq.s32.totalorder %s23, 0
      %p134 = por %p132, %p133
      %s136 = sadd.s32 %s135, 1
      %p139 = scmp.eq.s32.totalorder %s17, 1
      %p140 = scmp.ne.s32.totalorder %s135, %s137
      %p141 = scmp.eq.s32.totalorder %s17, 0
      %p142 = por %p140, %p141
      %p143 = scmp.ne.s32.totalorder %s135, %s137
      %p144 = scmp.eq.s32.totalorder %s22, 1
      %p145 = por %p143, %p144
      %p146 = scmp.ne.s32.totalorder %s137, %s138
      %p147 = scmp.eq.s32.totalorder %s22, 0
      %p148 = por %p146, %p147
      %p149 = scmp.ne.s32.totalorder %s137, %s138
      %p150 = scmp.eq.s32.totalorder %s23, 1
      %p151 = por %p149, %p150
      %p153 = scmp.ne.s32.totalorder %s138, %s152
      %p154 = scmp.eq.s32.totalorder %s23, 0
      %p155 = por %p153, %p154
      %s157 = sadd.s32 %s156, 1
      %p160 = scmp.eq.s32.totalorder %s17, 1
      %p161 = scmp.ne.s32.totalorder %s156, %s158
      %p162 = scmp.eq.s32.totalorder %s17, 0
      %p163 = por %p161, %p162
      %p164 = scmp.ne.s32.totalorder %s156, %s158
      %p165 = scmp.eq.s32.totalorder %s22, 1
      %p166 = por %p164, %p165
      %p167 = scmp.ne.s32.totalorder %s158, %s159
      %p168 = scmp.eq.s32.totalorder %s22, 0
      %p169 = por %p167, %p168
      %p170 = scmp.ne.s32.totalorder %s158, %s159
      %p171 = scmp.eq.s32.totalorder %s23, 1
      %p172 = por %p170, %p171
      %p174 = scmp.ne.s32.totalorder %s159, %s173
      %p175 = scmp.eq.s32.totalorder %s23, 0
      %p176 = por %p174, %p175
      %s177 = ssub.s32 %s17, %s24
      %p178 = scmp.eq.s32.totalorder %s177, 0
      %s180 = sadd.s32 %s179, 1
      %s181 = scalar_select %p178, %s179, %s180
      %p184 = pneg %p178
      %p185 = scmp.eq.s32.totalorder %s17, 1
      %p186 = por %p184, %p185
      %p187 = scmp.ne.s32.totalorder %s179, %s182
      %p188 = scmp.eq.s32.totalorder %s17, 0
      %p189 = por %p187, %p188
      %p190 = scmp.ne.s32.totalorder %s179, %s182
      %p191 = scmp.eq.s32.totalorder %s22, 1
      %p192 = por %p190, %p191
      %p193 = scmp.ne.s32.totalorder %s182, %s183
      %p194 = scmp.eq.s32.totalorder %s22, 0
      %p195 = por %p193, %p194
      %p196 = scmp.ne.s32.totalorder %s182, %s183
      %p197 = scmp.eq.s32.totalorder %s23, 1
      %p198 = por %p196, %p197
      %p200 = scmp.ne.s32.totalorder %s183, %s199
      %p201 = scmp.eq.s32.totalorder %s23, 0
      %p202 = por %p200, %p201
      %s203 = ssub.s32 %s17, %s24
      %p204 = scmp.eq.s32.totalorder %s203, 0
      %s206 = sadd.s32 %s205, 1
      %s207 = scalar_select %p204, %s205, %s206
      %p210 = pneg %p204
      %p211 = scmp.eq.s32.totalorder %s17, 1
      %p212 = por %p210, %p211
      %p213 = scmp.ne.s32.totalorder %s205, %s208
      %p214 = scmp.eq.s32.totalorder %s17, 0
      %p215 = por %p213, %p214
      %p216 = scmp.ne.s32.totalorder %s205, %s208
      %p217 = scmp.eq.s32.totalorder %s22, 1
      %p218 = por %p216, %p217
      %p219 = scmp.ne.s32.totalorder %s208, %s209
      %p220 = scmp.eq.s32.totalorder %s22, 0
      %p221 = por %p219, %p220
      %p222 = scmp.ne.s32.totalorder %s208, %s209
      %p223 = scmp.eq.s32.totalorder %s23, 1
      %p224 = por %p222, %p223
      %p226 = scmp.ne.s32.totalorder %s209, %s225
      %p227 = scmp.eq.s32.totalorder %s23, 0
      %p228 = por %p226, %p227
      %p229 = scmp.le.s32.totalorder 1, %s17
      %p230 = scmp.lt.s32.totalorder %s17, 3
      %p231 = pnand %p229, %p230
      %p232 = pneg %p231
      // Predicated region
      $region9: #{tpu_custom_call.1} parent=5 // pred_check
        _
      $region10: #{tpu_custom_call.1} parent=5 // pred_check_branch
        %234 = sbr.rel (%p231) target = $region12
      $region11: #{tpu_custom_call.1} parent=5 // pred_region
        %s235 = ssub.s32 %s17, 1
        // Predicated region
        $region13: #{tpu_custom_call.1} parent=11 // pred_check
          %p236 = pneg %p64
        $region14: #{tpu_custom_call.1} parent=11 // pred_check_branch
          %238 = sbr.rel (%p236) target = $region16
        $region15: #{tpu_custom_call.1} parent=11 // pred_region
          _
        $region16: #{tpu_custom_call.1} parent=11 // pred_fallthru
          _
        // Predicated region
        $region17: #{tpu_custom_call.1} parent=11 // pred_check
          %p239 = pneg %p85
        $region18: #{tpu_custom_call.1} parent=11 // pred_check_branch
          %241 = sbr.rel (%p239) target = $region20
        $region19: #{tpu_custom_call.1} parent=11 // pred_region
          _
        $region20: #{tpu_custom_call.1} parent=11 // pred_fallthru
          _
        // Predicated region
        $region21: #{tpu_custom_call.1} parent=11 // pred_check
          %p242 = pneg %p106
        $region22: #{tpu_custom_call.1} parent=11 // pred_check_branch
          %244 = sbr.rel (%p242) target = $region24
        $region23: #{tpu_custom_call.1} parent=11 // pred_region
          %s246 = ssub.s32 4096, 4096
          %247 = vsyncadd [#allocation3], %s246
          %s248 = sshll.u32 [#allocation2], 4
          %s249 = int_to_ptr.vmem [resolvable:$true] %s248
          %254 = dma.hbm_to_vmem [thread:$0]  %s3, 4096, %s249, [#allocation3], 128, 128, 8
        $region24: #{tpu_custom_call.1} parent=11 // pred_fallthru
          _
        // Predicated region
        $region25: #{tpu_custom_call.1} parent=11 // pred_check
          %p255 = pneg %p127
        $region26: #{tpu_custom_call.1} parent=11 // pred_check_branch
          %257 = sbr.rel (%p255) target = $region28
        $region27: #{tpu_custom_call.1} parent=11 // pred_region
          _
        $region28: #{tpu_custom_call.1} parent=11 // pred_fallthru
          _
        // Predicated region
        $region29: #{tpu_custom_call.1} parent=11 // pred_check
          %p258 = pneg %p148
        $region30: #{tpu_custom_call.1} parent=11 // pred_check_branch
          %260 = sbr.rel (%p258) target = $region32
        $region31: #{tpu_custom_call.1} parent=11 // pred_region
          %s262 = ssub.s32 2048, 2048
          %263 = vsyncadd [#allocation5], %s262
          %s264 = sshll.u32 [#allocation4], 4
          %s265 = int_to_ptr.vmem [resolvable:$true] %s264
          %270 = dma.hbm_to_vmem [thread:$0]  %s5, 2048, %s265, [#allocation5], 64, 64, 4
        $region32: #{tpu_custom_call.1} parent=11 // pred_fallthru
          _
        // Predicated region
        $region33: #{tpu_custom_call.1} parent=11 // pred_check
          %p271 = pneg %p169
        $region34: #{tpu_custom_call.1} parent=11 // pred_check_branch
          %273 = sbr.rel (%p271) target = $region36
        $region35: #{tpu_custom_call.1} parent=11 // pred_region
          _
        $region36: #{tpu_custom_call.1} parent=11 // pred_fallthru
          _
      $region12: #{tpu_custom_call.1} parent=5 // pred_fallthru
        _
      %p274 = scmp.lt.s32.totalorder %s17, 2
      // Predicated region
      $region37: #{tpu_custom_call.1} parent=5 // pred_check
        %p275 = pneg %p274
      $region38: #{tpu_custom_call.1} parent=5 // pred_check_branch
        %277 = sbr.rel (%p275) target = $region40
      $region39: #{tpu_custom_call.1} parent=5 // pred_region
        // Predicated region
        $region41: #{tpu_custom_call.1} parent=39 // pred_check
          %p278 = pneg %p37
        $region42: #{tpu_custom_call.1} parent=39 // pred_check_branch
          %280 = sbr.rel (%p278) target = $region44
        $region43: #{tpu_custom_call.1} parent=39 // pred_region
          %s281 = smul.u32 2, %s17
          %p282 = scmp.lt.s32.totalorder %s281, 3
          %s283 = scalar_select %p282, %s281, 3
          %s284 = smul.addr %s283, 8
          %s285 = scalar_lea.vmem %s0, %s284
          %s286 = smul.u32 2, %s17
        $region44: #{tpu_custom_call.1} parent=39 // pred_fallthru
          _
      $region40: #{tpu_custom_call.1} parent=5 // pred_fallthru
        _
      %p287 = scmp.le.s32.totalorder 1, %s17
      %p288 = scmp.lt.s32.totalorder %s17, 3
      %p289 = pnand %p287, %p288
      %p290 = pneg %p289
      // Predicated region
      $region45: #{tpu_custom_call.1} parent=5 // pred_check
        _
      $region46: #{tpu_custom_call.1} parent=5 // pred_check_branch
        %292 = sbr.rel (%p289) target = $region48
      $region47: #{tpu_custom_call.1} parent=5 // pred_region
        %s293 = ssub.s32 %s17, 1
        // Predicated region
        $region49: #{tpu_custom_call.1} parent=47 // pred_check
          %p294 = pneg %p106
        $region50: #{tpu_custom_call.1} parent=47 // pred_check_branch
          %296 = sbr.rel (%p294) target = $region52
        $region51: #{tpu_custom_call.1} parent=47 // pred_region
          %297 = dma.done [#allocation3], 4096
        $region52: #{tpu_custom_call.1} parent=47 // pred_fallthru
          _
        // Predicated region
        $region53: #{tpu_custom_call.1} parent=47 // pred_check
          %p298 = pneg %p148
        $region54: #{tpu_custom_call.1} parent=47 // pred_check_branch
          %300 = sbr.rel (%p298) target = $region56
        $region55: #{tpu_custom_call.1} parent=47 // pred_region
          %301 = dma.done [#allocation5], 2048
        $region56: #{tpu_custom_call.1} parent=47 // pred_fallthru
          _
        %s302 = smul.u32 2, %s22
        %p303 = scmp.lt.s32.totalorder %s302, 3
        %s304 = scalar_select %p303, %s302, 3
        %s305 = smul.addr %s304, 8
        %s306 = scalar_lea.vmem %s0, %s305
        %p307 = pneg %p43
        %p308 = pneg %p40
        %p309 = pneg %p64
        %p310 = pneg %p61
        %p311 = pneg %p85
        %p312 = pneg %p82
        %p313 = pneg %p106
        %p314 = pneg %p103
        %p315 = pneg %p127
        %p316 = pneg %p124
        %p317 = pneg %p148
        %p318 = pneg %p145
        %p319 = pneg %p169
        %p320 = pneg %p166
        %p321 = pneg %p195
        %p322 = pneg %p192
        %s323 = smul.u32 2, %s22
        %p324 = scmp.lt.s32.totalorder %s323, 3
        %s325 = scalar_select %p324, %s323, 3
        %s326 = smul.addr %s325, 8
        %s327 = scalar_lea.vmem %s7, %s326
        %p328 = pneg %p221
        %p329 = pneg %p218
        %s330 = smul.u32 2, %s22
        %p331 = scmp.lt.s32.totalorder %s330, 3
        %s332 = scalar_select %p331, %s330, 3
        %s333 = smul.addr %s332, 8
        %s334 = scalar_lea.vmem %s8, %s333
        %s335 = smul.u32 2, %s22
        %p336 = scmp.lt.s32.totalorder %s335, 3
        %s337 = scalar_select %p336, %s335, 3
        %s338 = smul.addr %s337, 8
        %s339 = scalar_lea.vmem %s0, %s338
        %s340 = smul.u32 2, %s22
        %s341 = smul.u32 2, %s22
        %p342 = scmp.lt.s32.totalorder %s341, 3
        %s343 = scalar_select %p342, %s341, 3
        %s344 = smul.addr %s343, 8
        %s345 = scalar_lea.vmem %s7, %s344
        %s346 = smul.u32 2, %s22
        %s347 = smul.u32 2, %s22
        %p348 = scmp.lt.s32.totalorder %s347, 3
        %s349 = scalar_select %p348, %s347, 3
        %s350 = smul.addr %s349, 8
        %s351 = scalar_lea.vmem %s8, %s350
        %s352 = smul.u32 2, %s22
        %v354 = vld [vmem:[%s339] sm:$0xff]
        %v355 = vld [vmem:[%s339 + $0x8] sm:$0xff]
        %v356 = vpack.c.bf16 %v355, %v354
        %v357 = vld [vmem:[%s1] sm:$0xff]
        %v358 = vld [vmem:[%s1 + $0x8] sm:$0xff]
        %v359 = vld [vmem:[%s2] sm:$0x3]
        %v361 = vlaneseq
        %v362 = vshrl.u32 %v361, 7
        %v363 = vsub.s32 0, %v362
        %v364 = vrot.slane %v359, %v363
        %v365 = vlaneseq
        %v366 = vshrl.u32 %v365, 7
        %v367 = vsub.s32 1, %v366
        %v368 = vrot.slane %v359, %v367
        %v373 = vunpack.c.l.b16 %v357
        %v374 = vunpack.c.h.b16 %v357
        %v375 = vunpack.c.l.b16 %v358
        %v376 = vunpack.c.h.b16 %v358
        %v377 = vpack.c.b16 %v375, %v373
        %v378 = vpack.c.b16 %v376, %v374
        %vm381 = vcmask 130048
        %v383 = vsel %vm381, %v356, 0
        %385 = vmatprep.subr.bf16.mxu0 %v378
        %386 = vmatpush1.bf16.msra.mxu0 %v377
        %387 = vmatprep.subr.bf16.mxu0 0
        %388 = vmatpush1.bf16.msra.mxu0 0
        %389 = vmatprep.subr.bf16.mxu0 0
        %390 = vmatpush1.bf16.msra.mxu0 0
        %391 = vmatprep.subr.bf16.mxu0 0
        %392 = vmatpush1.bf16.msra.mxu0 0
        %393 = vmatprep.subr.bf16.mxu0 0
        %394 = vmatpush1.bf16.msra.mxu0 0
        %395 = vmatprep.subr.bf16.mxu0 0
        %396 = vmatpush1.bf16.msra.mxu0 0
        %397 = vmatprep.subr.bf16.mxu0 0
        %398 = vmatpush1.bf16.msra.mxu0 0
        %399 = vmatprep.subr.bf16.mxu0 0
        %400 = vmatpush1.bf16.msra.mxu0 0
        %401 = vmatprep.subr.bf16.mxu0 0
        %402 = vmatpush1.bf16.msra.mxu0 0
        %403 = vmatprep.subr.bf16.mxu0 0
        %404 = vmatpush1.bf16.msra.mxu0 0
        %405 = vmatprep.subr.bf16.mxu0 0
        %406 = vmatpush1.bf16.msra.mxu0 0
        %407 = vmatprep.subr.bf16.mxu0 0
        %408 = vmatpush1.bf16.msra.mxu0 0
        %409 = vmatprep.subr.bf16.mxu0 0
        %410 = vmatpush1.bf16.msra.mxu0 0
        %411 = vmatprep.subr.bf16.mxu0 0
        %412 = vmatpush1.bf16.msra.mxu0 0
        %413 = vmatprep.subr.bf16.mxu0 0
        %414 = vmatpush1.bf16.msra.mxu0 0
        %415 = vmatprep.subr.bf16.mxu0 0
        %416 = vmatpush1.bf16.msra.mxu0 0
        %417 = vmatprep.mubr.bf16.mxu0 0
        %418 = vmatmul.mubr.bf16.gmra.mrb[0].mxu0 %v383
        %v419 = vpop.f32.mrb[0].mxu0
        %v420 = vadd.f32 %v364, %v419
        %v421 = vpop.f32.mrb[0].mxu0
        %v422 = vadd.f32 %v368, %v421
        %v423 = vpop.f32.mrb[0].mxu0
        %v424 = vadd.f32 %v364, %v423
        %v425 = vpop.f32.mrb[0].mxu0
        %v426 = vadd.f32 %v368, %v425
        %427 = vdwg.mxu0
        %v428 = vmax.f32 %v420, 0.0
        %v429 = vmax.f32 %v422, 0.0
        %v430 = vmax.f32 %v424, 0.0
        %v431 = vmax.f32 %v426, 0.0
        %v432 = vpack.c.bf16 %v430, %v428
        %v433 = vpack.c.bf16 %v431, %v429
        %v434 = vld [vmem:[#allocation2] sm:$0xff]
        %v435 = vld [vmem:[#allocation2 + $0x8] sm:$0xff]
        %v436 = vld [vmem:[#allocation2 + $0x10] sm:$0xff]
        %v437 = vld [vmem:[#allocation2 + $0x18] sm:$0xff]
        %v438 = vld [vmem:[#allocation2 + $0x20] sm:$0xff]
        %v439 = vld [vmem:[#allocation2 + $0x28] sm:$0xff]
        %v440 = vld [vmem:[#allocation2 + $0x30] sm:$0xff]
        %v441 = vld [vmem:[#allocation2 + $0x38] sm:$0xff]
        %v442 = vld [vmem:[#allocation2 + $0x40] sm:$0xff]
        %v443 = vld [vmem:[#allocation2 + $0x48] sm:$0xff]
        %v444 = vld [vmem:[#allocation2 + $0x50] sm:$0xff]
        %v445 = vld [vmem:[#allocation2 + $0x58] sm:$0xff]
        %v446 = vld [vmem:[#allocation2 + $0x60] sm:$0xff]
        %v447 = vld [vmem:[#allocation2 + $0x68] sm:$0xff]
        %v448 = vld [vmem:[#allocation2 + $0x70] sm:$0xff]
        %v449 = vld [vmem:[#allocation2 + $0x78] sm:$0xff]
        %v450 = vld [vmem:[#allocation2 + $0x80] sm:$0xff]
        %v451 = vld [vmem:[#allocation2 + $0x88] sm:$0xff]
        %v452 = vld [vmem:[#allocation2 + $0x90] sm:$0xff]
        %v453 = vld [vmem:[#allocation2 + $0x98] sm:$0xff]
        %v454 = vld [vmem:[#allocation2 + $0xa0] sm:$0xff]
        %v455 = vld [vmem:[#allocation2 + $0xa8] sm:$0xff]
        %v456 = vld [vmem:[#allocation2 + $0xb0] sm:$0xff]
        %v457 = vld [vmem:[#allocation2 + $0xb8] sm:$0xff]
        %v458 = vld [vmem:[#allocation2 + $0xc0] sm:$0xff]
        %v459 = vld [vmem:[#allocation2 + $0xc8] sm:$0xff]
        %v460 = vld [vmem:[#allocation2 + $0xd0] sm:$0xff]
        %v461 = vld [vmem:[#allocation2 + $0xd8] sm:$0xff]
        %v462 = vld [vmem:[#allocation2 + $0xe0] sm:$0xff]
        %v463 = vld [vmem:[#allocation2 + $0xe8] sm:$0xff]
        %v464 = vld [vmem:[#allocation2 + $0xf0] sm:$0xff]
        %v465 = vld [vmem:[#allocation2 + $0xf8] sm:$0xff]
        %v466 = vld [vmem:[%s4] sm:$0x3]
        %v468 = vlaneseq
        %v469 = vshrl.u32 %v468, 7
        %v470 = vsub.s32 0, %v469
        %v471 = vrot.slane %v466, %v470
        %v472 = vlaneseq
        %v473 = vshrl.u32 %v472, 7
        %v474 = vsub.s32 1, %v473
        %v475 = vrot.slane %v466, %v474
        %v510 = vunpack.c.l.b16 %v434
        %v511 = vunpack.c.h.b16 %v434
        %v512 = vunpack.c.l.b16 %v435
        %v513 = vunpack.c.h.b16 %v435
        %v514 = vunpack.c.l.b16 %v436
        %v515 = vunpack.c.h.b16 %v436
        %v516 = vunpack.c.l.b16 %v437
        %v517 = vunpack.c.h.b16 %v437
        %v518 = vunpack.c.l.b16 %v438
        %v519 = vunpack.c.h.b16 %v438
        %v520 = vunpack.c.l.b16 %v439
        %v521 = vunpack.c.h.b16 %v439
        %v522 = vunpack.c.l.b16 %v440
        %v523 = vunpack.c.h.b16 %v440
        %v524 = vunpack.c.l.b16 %v441
        %v525 = vunpack.c.h.b16 %v441
        %v526 = vunpack.c.l.b16 %v442
        %v527 = vunpack.c.h.b16 %v442
        %v528 = vunpack.c.l.b16 %v443
        %v529 = vunpack.c.h.b16 %v443
        %v530 = vunpack.c.l.b16 %v444
        %v531 = vunpack.c.h.b16 %v444
        %v532 = vunpack.c.l.b16 %v445
        %v533 = vunpack.c.h.b16 %v445
        %v534 = vunpack.c.l.b16 %v446
        %v535 = vunpack.c.h.b16 %v446
        %v536 = vunpack.c.l.b16 %v447
        %v537 = vunpack.c.h.b16 %v447
        %v538 = vunpack.c.l.b16 %v448
        %v539 = vunpack.c.h.b16 %v448
        %v540 = vunpack.c.l.b16 %v449
        %v541 = vunpack.c.h.b16 %v449
        %v542 = vunpack.c.l.b16 %v450
        %v543 = vunpack.c.h.b16 %v450
        %v544 = vunpack.c.l.b16 %v451
        %v545 = vunpack.c.h.b16 %v451
        %v546 = vunpack.c.l.b16 %v452
        %v547 = vunpack.c.h.b16 %v452
        %v548 = vunpack.c.l.b16 %v453
        %v549 = vunpack.c.h.b16 %v453
        %v550 = vunpack.c.l.b16 %v454
        %v551 = vunpack.c.h.b16 %v454
        %v552 = vunpack.c.l.b16 %v455
        %v553 = vunpack.c.h.b16 %v455
        %v554 = vunpack.c.l.b16 %v456
        %v555 = vunpack.c.h.b16 %v456
        %v556 = vunpack.c.l.b16 %v457
        %v557 = vunpack.c.h.b16 %v457
        %v558 = vunpack.c.l.b16 %v458
        %v559 = vunpack.c.h.b16 %v458
        %v560 = vunpack.c.l.b16 %v459
        %v561 = vunpack.c.h.b16 %v459
        %v562 = vunpack.c.l.b16 %v460
        %v563 = vunpack.c.h.b16 %v460
        %v564 = vunpack.c.l.b16 %v461
        %v565 = vunpack.c.h.b16 %v461
        %v566 = vunpack.c.l.b16 %v462
        %v567 = vunpack.c.h.b16 %v462
        %v568 = vunpack.c.l.b16 %v463
        %v569 = vunpack.c.h.b16 %v463
        %v570 = vunpack.c.l.b16 %v464
        %v571 = vunpack.c.h.b16 %v464
        %v572 = vunpack.c.l.b16 %v465
        %v573 = vunpack.c.h.b16 %v465
        %v574 = vpack.c.b16 %v512, %v510
        %v575 = vpack.c.b16 %v513, %v511
        %v576 = vpack.c.b16 %v516, %v514
        %v577 = vpack.c.b16 %v517, %v515
        %v578 = vpack.c.b16 %v520, %v518
        %v579 = vpack.c.b16 %v521, %v519
        %v580 = vpack.c.b16 %v524, %v522
        %v581 = vpack.c.b16 %v525, %v523
        %v582 = vpack.c.b16 %v528, %v526
        %v583 = vpack.c.b16 %v529, %v527
        %v584 = vpack.c.b16 %v532, %v530
        %v585 = vpack.c.b16 %v533, %v531
        %v586 = vpack.c.b16 %v536, %v534
        %v587 = vpack.c.b16 %v537, %v535
        %v588 = vpack.c.b16 %v540, %v538
        %v589 = vpack.c.b16 %v541, %v539
        %v590 = vpack.c.b16 %v544, %v542
        %v591 = vpack.c.b16 %v545, %v543
        %v592 = vpack.c.b16 %v548, %v546
        %v593 = vpack.c.b16 %v549, %v547
        %v594 = vpack.c.b16 %v552, %v550
        %v595 = vpack.c.b16 %v553, %v551
        %v596 = vpack.c.b16 %v556, %v554
        %v597 = vpack.c.b16 %v557, %v555
        %v598 = vpack.c.b16 %v560, %v558
        %v599 = vpack.c.b16 %v561, %v559
        %v600 = vpack.c.b16 %v564, %v562
        %v601 = vpack.c.b16 %v565, %v563
        %v602 = vpack.c.b16 %v568, %v566
        %v603 = vpack.c.b16 %v569, %v567
        %v604 = vpack.c.b16 %v572, %v570
        %v605 = vpack.c.b16 %v573, %v571
        %638 = vmatprep.subr.bf16.mxu0 %v575
        %639 = vmatpush1.bf16.msra.mxu0 %v574
        %640 = vmatprep.subr.bf16.mxu0 %v577
        %641 = vmatpush1.bf16.msra.mxu0 %v576
        %642 = vmatprep.subr.bf16.mxu0 %v579
        %643 = vmatpush1.bf16.msra.mxu0 %v578
        %644 = vmatprep.subr.bf16.mxu0 %v581
        %645 = vmatpush1.bf16.msra.mxu0 %v580
        %646 = vmatprep.subr.bf16.mxu0 %v583
        %647 = vmatpush1.bf16.msra.mxu0 %v582
        %648 = vmatprep.subr.bf16.mxu0 %v585
        %649 = vmatpush1.bf16.msra.mxu0 %v584
        %650 = vmatprep.subr.bf16.mxu0 %v587
        %651 = vmatpush1.bf16.msra.mxu0 %v586
        %652 = vmatprep.subr.bf16.mxu0 %v589
        %653 = vmatpush1.bf16.msra.mxu0 %v588
        %654 = vmatprep.subr.bf16.mxu0 %v591
        %655 = vmatpush1.bf16.msra.mxu0 %v590
        %656 = vmatprep.subr.bf16.mxu0 %v593
        %657 = vmatpush1.bf16.msra.mxu0 %v592
        %658 = vmatprep.subr.bf16.mxu0 %v595
        %659 = vmatpush1.bf16.msra.mxu0 %v594
        %660 = vmatprep.subr.bf16.mxu0 %v597
        %661 = vmatpush1.bf16.msra.mxu0 %v596
        %662 = vmatprep.subr.bf16.mxu0 %v599
        %663 = vmatpush1.bf16.msra.mxu0 %v598
        %664 = vmatprep.subr.bf16.mxu0 %v601
        %665 = vmatpush1.bf16.msra.mxu0 %v600
        %666 = vmatprep.subr.bf16.mxu0 %v603
        %667 = vmatpush1.bf16.msra.mxu0 %v602
        %668 = vmatprep.subr.bf16.mxu0 %v605
        %669 = vmatpush1.bf16.msra.mxu0 %v604
        %670 = vmatprep.mubr.bf16.mxu0 %v433
        %671 = vmatmul.mubr.bf16.gmra.mrb[0].mxu0 %v432
        %v672 = vpop.f32.mrb[0].mxu0
        %v673 = vadd.f32 %v471, %v672
        %v674 = vpop.f32.mrb[0].mxu0
        %v675 = vadd.f32 %v475, %v674
        %v676 = vpop.f32.mrb[0].mxu0
        %v677 = vadd.f32 %v471, %v676
        %v678 = vpop.f32.mrb[0].mxu0
        %v679 = vadd.f32 %v475, %v678
        %680 = vdwg.mxu0
        %v681 = vmax.f32 %v673, 0.0
        %v682 = vmax.f32 %v675, 0.0
        %v683 = vmax.f32 %v677, 0.0
        %v684 = vmax.f32 %v679, 0.0
        %v685 = vpack.c.bf16 %v683, %v681
        %v686 = vpack.c.bf16 %v684, %v682
        %v687 = vld [vmem:[#allocation4] sm:$0xf]
        %v688 = vld [vmem:[#allocation4 + $0x4] sm:$0xf]
        %v689 = vld [vmem:[#allocation4 + $0x8] sm:$0xf]
        %v690 = vld [vmem:[#allocation4 + $0xc] sm:$0xf]
        %v691 = vld [vmem:[#allocation4 + $0x10] sm:$0xf]
        %v692 = vld [vmem:[#allocation4 + $0x14] sm:$0xf]
        %v693 = vld [vmem:[#allocation4 + $0x18] sm:$0xf]
        %v694 = vld [vmem:[#allocation4 + $0x1c] sm:$0xf]
        %v695 = vld [vmem:[#allocation4 + $0x20] sm:$0xf]
        %v696 = vld [vmem:[#allocation4 + $0x24] sm:$0xf]
        %v697 = vld [vmem:[#allocation4 + $0x28] sm:$0xf]
        %v698 = vld [vmem:[#allocation4 + $0x2c] sm:$0xf]
        %v699 = vld [vmem:[#allocation4 + $0x30] sm:$0xf]
        %v700 = vld [vmem:[#allocation4 + $0x34] sm:$0xf]
        %v701 = vld [vmem:[#allocation4 + $0x38] sm:$0xf]
        %v702 = vld [vmem:[#allocation4 + $0x3c] sm:$0xf]
        %v703 = vld [vmem:[#allocation4 + $0x40] sm:$0xf]
        %v704 = vld [vmem:[#allocation4 + $0x44] sm:$0xf]
        %v705 = vld [vmem:[#allocation4 + $0x48] sm:$0xf]
        %v706 = vld [vmem:[#allocation4 + $0x4c] sm:$0xf]
        %v707 = vld [vmem:[#allocation4 + $0x50] sm:$0xf]
        %v708 = vld [vmem:[#allocation4 + $0x54] sm:$0xf]
        %v709 = vld [vmem:[#allocation4 + $0x58] sm:$0xf]
        %v710 = vld [vmem:[#allocation4 + $0x5c] sm:$0xf]
        %v711 = vld [vmem:[#allocation4 + $0x60] sm:$0xf]
        %v712 = vld [vmem:[#allocation4 + $0x64] sm:$0xf]
        %v713 = vld [vmem:[#allocation4 + $0x68] sm:$0xf]
        %v714 = vld [vmem:[#allocation4 + $0x6c] sm:$0xf]
        %v715 = vld [vmem:[#allocation4 + $0x70] sm:$0xf]
        %v716 = vld [vmem:[#allocation4 + $0x74] sm:$0xf]
        %v717 = vld [vmem:[#allocation4 + $0x78] sm:$0xf]
        %v718 = vld [vmem:[#allocation4 + $0x7c] sm:$0xf]
        %v719 = vld [vmem:[%s6] sm:$0x1]
        %v721 = vlaneseq
        %v722 = vshrl.u32 %v721, 7
        %v723 = vsub.s32 0, %v722
        %v724 = vrot.slane %v719, %v723
        %v758 = vunpack.c.l.b16 %v687
        %v759 = vunpack.c.l.b16 %v688
        %v760 = vunpack.c.l.b16 %v689
        %v761 = vunpack.c.l.b16 %v690
        %v762 = vunpack.c.l.b16 %v691
        %v763 = vunpack.c.l.b16 %v692
        %v764 = vunpack.c.l.b16 %v693
        %v765 = vunpack.c.l.b16 %v694
        %v766 = vunpack.c.l.b16 %v695
        %v767 = vunpack.c.l.b16 %v696
        %v768 = vunpack.c.l.b16 %v697
        %v769 = vunpack.c.l.b16 %v698
        %v770 = vunpack.c.l.b16 %v699
        %v771 = vunpack.c.l.b16 %v700
        %v772 = vunpack.c.l.b16 %v701
        %v773 = vunpack.c.l.b16 %v702
        %v774 = vunpack.c.l.b16 %v703
        %v775 = vunpack.c.l.b16 %v704
        %v776 = vunpack.c.l.b16 %v705
        %v777 = vunpack.c.l.b16 %v706
        %v778 = vunpack.c.l.b16 %v707
        %v779 = vunpack.c.l.b16 %v708
        %v780 = vunpack.c.l.b16 %v709
        %v781 = vunpack.c.l.b16 %v710
        %v782 = vunpack.c.l.b16 %v711
        %v783 = vunpack.c.l.b16 %v712
        %v784 = vunpack.c.l.b16 %v713
        %v785 = vunpack.c.l.b16 %v714
        %v786 = vunpack.c.l.b16 %v715
        %v787 = vunpack.c.l.b16 %v716
        %v788 = vunpack.c.l.b16 %v717
        %v789 = vunpack.c.l.b16 %v718
        %v790 = vpack.c.b16 %v759, %v758
        %v791 = vpack.c.b16 %v761, %v760
        %v792 = vpack.c.b16 %v763, %v762
        %v793 = vpack.c.b16 %v765, %v764
        %v794 = vpack.c.b16 %v767, %v766
        %v795 = vpack.c.b16 %v769, %v768
        %v796 = vpack.c.b16 %v771, %v770
        %v797 = vpack.c.b16 %v773, %v772
        %v798 = vpack.c.b16 %v775, %v774
        %v799 = vpack.c.b16 %v777, %v776
        %v800 = vpack.c.b16 %v779, %v778
        %v801 = vpack.c.b16 %v781, %v780
        %v802 = vpack.c.b16 %v783, %v782
        %v803 = vpack.c.b16 %v785, %v784
        %v804 = vpack.c.b16 %v787, %v786
        %v805 = vpack.c.b16 %v789, %v788
        %822 = vmatprep.subr.bf16.mxu0 0
        %823 = vmatpush1.bf16.msra.mxu0 %v790
        %824 = vmatprep.subr.bf16.mxu0 0
        %825 = vmatpush1.bf16.msra.mxu0 %v791
        %826 = vmatprep.subr.bf16.mxu0 0
        %827 = vmatpush1.bf16.msra.mxu0 %v792
        %828 = vmatprep.subr.bf16.mxu0 0
        %829 = vmatpush1.bf16.msra.mxu0 %v793
        %830 = vmatprep.subr.bf16.mxu0 0
        %831 = vmatpush1.bf16.msra.mxu0 %v794
        %832 = vmatprep.subr.bf16.mxu0 0
        %833 = vmatpush1.bf16.msra.mxu0 %v795
        %834 = vmatprep.subr.bf16.mxu0 0
        %835 = vmatpush1.bf16.msra.mxu0 %v796
        %836 = vmatprep.subr.bf16.mxu0 0
        %837 = vmatpush1.bf16.msra.mxu0 %v797
        %838 = vmatprep.subr.bf16.mxu0 0
        %839 = vmatpush1.bf16.msra.mxu0 %v798
        %840 = vmatprep.subr.bf16.mxu0 0
        %841 = vmatpush1.bf16.msra.mxu0 %v799
        %842 = vmatprep.subr.bf16.mxu0 0
        %843 = vmatpush1.bf16.msra.mxu0 %v800
        %844 = vmatprep.subr.bf16.mxu0 0
        %845 = vmatpush1.bf16.msra.mxu0 %v801
        %846 = vmatprep.subr.bf16.mxu0 0
        %847 = vmatpush1.bf16.msra.mxu0 %v802
        %848 = vmatprep.subr.bf16.mxu0 0
        %849 = vmatpush1.bf16.msra.mxu0 %v803
        %850 = vmatprep.subr.bf16.mxu0 0
        %851 = vmatpush1.bf16.msra.mxu0 %v804
        %852 = vmatprep.subr.bf16.mxu0 0
        %853 = vmatpush1.bf16.msra.mxu0 %v805
        %854 = vmatprep.mubr.bf16.mxu0 %v686
        %855 = vmatmul.mubr.bf16.gmra.mrb[0].mxu0 %v685
        %v856 = vpop.f32.mrb[0].mxu0
        %v857 = vadd.f32 %v724, %v856
        %v858 = vpop.f32.mrb[0].mxu0
        %v859 = vpop.f32.mrb[0].mxu0
        %v860 = vadd.f32 %v724, %v859
        %v861 = vpop.f32.mrb[0].mxu0
        %862 = vdwg.mxu0
        %vm863 = vcmask 48128
        %864 = vst.msk [vmem:[%s345] sm:$0xff] %vm863, %v857
        %865 = vst.msk [vmem:[%s345 + $0x8] sm:$0xff] %vm863, %v860
        %v866 = vmax.f32 %v857, -20.0
        %v867 = vmax.f32 %v860, -20.0
        %v868 = vmin.f32 %v866, 2.0
        %v869 = vmin.f32 %v867, 2.0
        %872 = vrot.lane.b32.xlu0 %v868, 122
        %v873 = vpop.permute.xlu0 %872
        %874 = vrot.lane.b32.xlu0 %v869, 122
        %v875 = vpop.permute.xlu0 %874
        %878 = vst.msk [vmem:[%s351] sm:$0xff] %vm863, %v873
        %879 = vst.msk [vmem:[%s351 + $0x8] sm:$0xff] %vm863, %v875
        %s880 = smul.u32 2, %s22
        %p881 = scmp.lt.s32.totalorder %s880, 3
        %s882 = scalar_select %p881, %s880, 3
        %s883 = smul.addr %s882, 8
        %s884 = scalar_lea.vmem %s7, %s883
        %s885 = smul.u32 2, %s22
        %p886 = scmp.lt.s32.totalorder %s885, 3
        %s887 = scalar_select %p886, %s885, 3
        %s888 = smul.addr %s887, 8
        %s889 = scalar_lea.vmem %s8, %s888
        // Predicated region
        $region57: #{tpu_custom_call.1} parent=47 // pred_check
          %p890 = pneg %p192
        $region58: #{tpu_custom_call.1} parent=47 // pred_check_branch
          %892 = sbr.rel (%p890) target = $region60
        $region59: #{tpu_custom_call.1} parent=47 // pred_region
          %s893 = smul.u32 2, %s22
        $region60: #{tpu_custom_call.1} parent=47 // pred_fallthru
          _
        // Predicated region
        $region61: #{tpu_custom_call.1} parent=47 // pred_check
          %p894 = pneg %p218
        $region62: #{tpu_custom_call.1} parent=47 // pred_check_branch
          %896 = sbr.rel (%p894) target = $region64
        $region63: #{tpu_custom_call.1} parent=47 // pred_region
          %s897 = smul.u32 2, %s22
        $region64: #{tpu_custom_call.1} parent=47 // pred_fallthru
          _
      $region48: #{tpu_custom_call.1} parent=5 // pred_fallthru
        _
      %p898 = scmp.le.s32.totalorder 2, %s17
      // Predicated region
      $region65: #{tpu_custom_call.1} parent=5 // pred_check
        %p899 = pneg %p898
      $region66: #{tpu_custom_call.1} parent=5 // pred_check_branch
        %901 = sbr.rel (%p899) target = $region68
      $region67: #{tpu_custom_call.1} parent=5 // pred_region
        %s902 = ssub.s32 %s17, 2
        // Predicated region
        $region69: #{tpu_custom_call.1} parent=67 // pred_check
          %p903 = pneg %p198
        $region70: #{tpu_custom_call.1} parent=67 // pred_check_branch
          %905 = sbr.rel (%p903) target = $region72
        $region71: #{tpu_custom_call.1} parent=67 // pred_region
          %s906 = smul.u32 2, %s23
          %p907 = scmp.lt.s32.totalorder %s906, 3
          %s908 = scalar_select %p907, %s906, 3
          %s909 = smul.addr %s908, 8
          %s910 = scalar_lea.vmem %s7, %s909
        $region72: #{tpu_custom_call.1} parent=67 // pred_fallthru
          _
        // Predicated region
        $region73: #{tpu_custom_call.1} parent=67 // pred_check
          %p911 = pneg %p224
        $region74: #{tpu_custom_call.1} parent=67 // pred_check_branch
          %913 = sbr.rel (%p911) target = $region76
        $region75: #{tpu_custom_call.1} parent=67 // pred_region
          %s914 = smul.u32 2, %s23
          %p915 = scmp.lt.s32.totalorder %s914, 3
          %s916 = scalar_select %p915, %s914, 3
          %s917 = smul.addr %s916, 8
          %s918 = scalar_lea.vmem %s8, %s917
        $region76: #{tpu_custom_call.1} parent=67 // pred_fallthru
          _
      $region68: #{tpu_custom_call.1} parent=5 // pred_fallthru
        _
    $region6: #{tpu_custom_call.1} parent=1 // loop_footer
      %s21 = sadd.s32 1, %s17
    $region7: #{tpu_custom_call.1} parent=1 // loop_footer_branch
      %16 = sbr.rel target = $region3
    $region8: #{tpu_custom_call.1} parent=1 // loop_exit
      _
    %919 = vsyncpa [#allocation3], 1
    %s920 = scalar_lea.sflag [#allocation3], 1
    %921 = vsyncpa %s920, 1
    %922 = vsyncpa [#allocation5], 1

</llo_original>
